<compile_context>
chip_gen: v7x
topology: tpu7x:2x2x1
jax: 0.10.0
libtpu: 0.0.40
codegen_flags: <defaults>
</compile_context>

<pallas_src>
import functools

import jax
import jax.numpy as jnp
from jax.experimental import pallas as pl
from jax.experimental.pallas import tpu as pltpu


def _round_up(x, m):
    return ((x + m - 1) // m) * m


# ----------------------------- Pallas kernels ------------------------------ #

def _decode_kernel(enc_ref, w_ref, b_ref, out_ref):
    # out = enc @ W + b  (per-timestep dense decode on the MXU).
    # Cast the activations to the weight dtype (bf16) in-kernel; accumulate f32.
    a = enc_ref[...].astype(w_ref.dtype)
    acc = jnp.dot(a, w_ref[...], preferred_element_type=jnp.float32)
    out_ref[...] = (acc + b_ref[...].astype(jnp.float32)).astype(out_ref.dtype)


def dense_decode(encodings, w, b, *, tm=256, tn=512):
    """encodings: [B, T, E] -> decoded: [B, T, D] via a tiled Pallas matmul."""
    B, T, E = encodings.shape
    D = w.shape[1]
    BT = B * T

    tm = int(min(tm, _round_up(BT, 8)))          # row tile (sublane-dense, mult of 8)
    tn = int(min(tn, D))                          # output-D tile (lane-dense)
    if tn % 128 != 0 or D % tn != 0:
        tn = D                                    # full-D fallback for odd D

    BTp = _round_up(BT, tm)
    enc2d = encodings.reshape(BT, E)
    if BTp != BT:
        enc2d = jnp.pad(enc2d, ((0, BTp - BT), (0, 0)))
    b2 = b.reshape(1, D)

    # Explicit VMEM budget: double-buffered enc/out tiles + resident (E, tn) weight.
    esz = enc2d.dtype.itemsize
    wsz = w.dtype.itemsize
    need = 2 * (tm * E * esz + E * tn * wsz + tn * b2.dtype.itemsize + tm * tn * 4)
    vmem_limit = int(min(max(2 * need, 32 << 20), 64 << 20))

    out = pl.pallas_call(
        _decode_kernel,
        out_shape=jax.ShapeDtypeStruct((BTp, D), jnp.float32),
        grid=(BTp // tm, D // tn),
        in_specs=[
            pl.BlockSpec((tm, E), lambda i, j: (i, 0)),   # timestep row tile
            pl.BlockSpec((E, tn), lambda i, j: (0, j)),   # weight column tile
            pl.BlockSpec((1, tn), lambda i, j: (0, j)),   # bias column tile
        ],
        out_specs=pl.BlockSpec((tm, tn), lambda i, j: (i, j)),
        compiler_params=pltpu.CompilerParams(
            dimension_semantics=("parallel", "parallel"),
            vmem_limit_bytes=vmem_limit),
    )(enc2d, w, b2)
    return out[:BT].reshape(B, T, D)


def _mse_kernel(pred_ref, tgt_ref, out_ref, acc_ref, *, inv_n):
    @pl.when(pl.program_id(0) == 0)
    def _():
        acc_ref[...] = jnp.zeros_like(acc_ref)

    d = pred_ref[...].astype(jnp.float32) - tgt_ref[...].astype(jnp.float32)
    acc_ref[...] += jnp.sum(d * d)

    @pl.when(pl.program_id(0) == pl.num_programs(0) - 1)
    def _():
        out_ref[...] = acc_ref[...] * inv_n


def mse_loss(pred, target, *, tm=512):
    """Mean-squared reconstruction error, tiled grid reduction in Pallas."""
    D = pred.shape[-1]
    p2 = pred.reshape(-1, D)
    t2 = target.reshape(-1, D)
    n_true = p2.size
    R = p2.shape[0]

    tm = int(min(tm, _round_up(R, 8)))
    Rp = _round_up(R, tm)
    if Rp != R:
        # Zero padding contributes nothing to the squared-error sum.
        p2 = jnp.pad(p2, ((0, Rp - R), (0, 0)))
        t2 = jnp.pad(t2, ((0, Rp - R), (0, 0)))

    need = 2 * tm * D * (p2.dtype.itemsize + t2.dtype.itemsize) + 4096
    vmem_limit = int(min(max(2 * need, 32 << 20), 64 << 20))

    out = pl.pallas_call(
        functools.partial(_mse_kernel, inv_n=float(1.0 / n_true)),
        out_shape=jax.ShapeDtypeStruct((1, 1), jnp.float32),
        grid=(Rp // tm,),
        in_specs=[
            pl.BlockSpec((tm, D), lambda i: (i, 0)),
            pl.BlockSpec((tm, D), lambda i: (i, 0)),
        ],
        out_specs=pl.BlockSpec((1, 1), lambda i: (0, 0)),
        scratch_shapes=[pltpu.VMEM((1, 1), jnp.float32)],
        compiler_params=pltpu.CompilerParams(
            dimension_semantics=("arbitrary",),
            vmem_limit_bytes=vmem_limit),
    )(p2, t2)
    return out[0, 0]


# --------------------------- Module translations --------------------------- #

class LinearSeqDecoder:
    """Concrete synthetic decoder: per-timestep linear decode + MSE recon loss."""

    def __init__(self, embed_dim, out_dim, key):
        kw, kb = jax.random.split(key)
        # Weights kept in bf16 for the MXU fast path; bias in f32 for the
        # f32 epilogue (v5e VPU has no bf16).
        self.w = (jax.random.normal(kw, (embed_dim, out_dim), jnp.float32)
                  * 0.02).astype(jnp.bfloat16)
        self.b = jax.random.normal(kb, (out_dim,), jnp.float32) * 0.02

    def decode_seq(self, inputs, encodings):
        return dense_decode(encodings, self.w, self.b)

    def loss(self, inputs, model_output, extra_action=True, first_image=True):
        # TODO(synk): `extra_action` / `first_image` have no concrete semantics
        # in the abstract base decoder; MSE reconstruction is the hot path.
        return mse_loss(model_output, inputs["targets"])


class RecBase:
    """Base module for dense reconstruction (JAX/Pallas translation)."""

    def __init__(self, hp, decoder):
        self._hp = hp
        self.decoder = decoder

    def forward(self, *args, **kwargs):
        raise NotImplementedError  # abstract in the PyTorch module too

    def _dense_decode(self, inputs, encodings, seq_len):
        return self.decoder.decode_seq(inputs, encodings)

    def loss(self, inputs, model_output, extra_action=True, first_image=True):
        return self.decoder.loss(inputs, model_output, extra_action, first_image)


# ---------------------------------- main ----------------------------------- #

if __name__ == "__main__":
    key = jax.random.PRNGKey(0)
    k_enc, k_tgt, k_dec = jax.random.split(key, 3)

    B, T, E, D = 2, 8, 32, 128  # small shapes: batch=2, seq=8, embed=32, decode=128

    encodings = jax.random.normal(k_enc, (B, T, E), jnp.float32)
    targets = jax.random.normal(k_tgt, (B, T, D), jnp.float32)
    inputs = {"targets": targets}

    decoder = LinearSeqDecoder(E, D, k_dec)
    module = RecBase(hp=None, decoder=decoder)

    decoded = module._dense_decode(inputs, encodings, seq_len=T)
    loss_val = module.loss(inputs, decoded)
    jax.block_until_ready(decoded)
    jax.block_until_ready(loss_val)

    # Reference check against plain JAX (same bf16-input / f32-accum recipe).
    ref_decoded = (
        jnp.dot(encodings.reshape(B * T, E).astype(jnp.bfloat16),
                decoder.w, preferred_element_type=jnp.float32)
        + decoder.b
    ).reshape(B, T, D)
    assert jnp.allclose(decoded, ref_decoded, atol=1e-2, rtol=1e-2), "decode mismatch"

    ref_loss = jnp.mean((decoded - targets) ** 2)
    assert jnp.allclose(loss_val, ref_loss, atol=1e-5, rtol=1e-5), "loss mismatch"

    print("KERNEL_OK")
</pallas_src>

<mosaic_0001>
module attributes {stable_mosaic.version = 11 : i64} {
  func.func @_decode_kernel(%arg0: i32, %arg1: i32, %arg2: memref<16x32xf32, #tpu.memory_space<vmem>>, %arg3: memref<32x128xbf16, #tpu.memory_space<vmem>>, %arg4: memref<1x128xf32, #tpu.memory_space<vmem>>, %arg5: memref<16x128xf32, #tpu.memory_space<vmem>>) attributes {dimension_semantics = [#tpu.dimension_semantics<parallel>, #tpu.dimension_semantics<parallel>], iteration_bounds = array<i64: 1, 1>, scalar_prefetch = 0 : i64, scratch_operands = 0 : i64, tpu.core_type = #tpu.core_type<tc>, window_params = [{transform_indices = @transform_0, window_bounds = array<i64: 16, 32>}, {transform_indices = @transform_1, window_bounds = array<i64: 32, 128>}, {transform_indices = @transform_2, window_bounds = array<i64: 1, 128>}, {transform_indices = @transform_3, window_bounds = array<i64: 16, 128>}]} {
    %c0 = arith.constant 0 : index
    %c0_0 = arith.constant 0 : index
    %0 = vector.load %arg2[%c0, %c0_0] : memref<16x32xf32, #tpu.memory_space<vmem>>, vector<16x32xf32>
    %1 = arith.truncf %0 : vector<16x32xf32> to vector<16x32xbf16>
    %c0_1 = arith.constant 0 : index
    %c0_2 = arith.constant 0 : index
    %2 = vector.load %arg3[%c0_1, %c0_2] : memref<32x128xbf16, #tpu.memory_space<vmem>>, vector<32x128xbf16>
    %cst = arith.constant dense<0.000000e+00> : vector<16x128xf32>
    %3 = tpu.matmul %1, %2, %cst {dimension_numbers = #tpu.dot_dimension_numbers<[1], [0], [0], [1], [0, 0, 1, 1], [], []>} : vector<16x32xbf16>, vector<32x128xbf16>, vector<16x128xf32> -> vector<16x128xf32>
    %c0_3 = arith.constant 0 : index
    %c0_4 = arith.constant 0 : index
    %4 = vector.load %arg4[%c0_3, %c0_4] : memref<1x128xf32, #tpu.memory_space<vmem>>, vector<1x128xf32>
    %5 = vector.broadcast %4 : vector<1x128xf32> to vector<16x128xf32>
    %6 = arith.addf %3, %5 : vector<16x128xf32>
    %c0_5 = arith.constant 0 : index
    %c0_6 = arith.constant 0 : index
    %7 = vector.load %arg5[%c0_5, %c0_6] : memref<16x128xf32, #tpu.memory_space<vmem>>, vector<16x128xf32>
    tpu.vector_store %arg5[%c0_5, %c0_6], %6 {strides = array<i32>} : memref<16x128xf32, #tpu.memory_space<vmem>>, vector<16x128xf32>,
    return
  }
  func.func @transform_0(%arg0: i32, %arg1: i32) -> (i32, i32) {
    %c0_i32 = arith.constant 0 : i32
    %c0_i32_0 = arith.constant 0 : i32
    return %arg0, %c0_i32 : i32, i32
  }
  func.func @transform_1(%arg0: i32, %arg1: i32) -> (i32, i32) {
    %c0_i32 = arith.constant 0 : i32
    %c0_i32_0 = arith.constant 0 : i32
    return %c0_i32, %arg1 : i32, i32
  }
  func.func @transform_2(%arg0: i32, %arg1: i32) -> (i32, i32) {
    %c0_i32 = arith.constant 0 : i32
    %c0_i32_0 = arith.constant 0 : i32
    return %c0_i32, %arg1 : i32, i32
  }
  func.func @transform_3(%arg0: i32, %arg1: i32) -> (i32, i32) {
    %c0_i32 = arith.constant 0 : i32
    return %arg0, %arg1 : i32, i32
  }
}

</mosaic_0001>

<llo_original>
// kernel: tpu_custom_call.1
$region0: #{tpu_custom_call.1}
  #allocation0 [shape = 'u32[]', space=smem, size = 0x4, offset = 0x4, fixed_abs, tag = 'smem constant byte address 0x4 - core index']
  #allocation1 [shape = 'u32[144,128]{1,0:T(1,128)}', space=vmem, size = 0x12000, scoped, tag = 'internal scratch']
  %s0 = inlined_call_operand.hbm [shape: f32[16,32], index: 0, kind: input, shape index: {}]
  %s1 = inlined_call_operand.hbm [shape: bf16[32,128], index: 1, kind: input, shape index: {}]
  %s2 = inlined_call_operand.vmem [shape: f32[1,128], index: 2, kind: input, shape index: {}]
  %s3 = inlined_call_operand.hbm [shape: f32[16,128], index: 3, kind: output, shape index: {}]
  %s4 = sld [smem:[#allocation0]]
  $region30: #{tpu_custom_call.1} parent=0
    _
  %s6 = ssub.s32 1, %s4
  %s7 = scalar_select 0, %s6, %s4
  $region1: #{tpu_custom_call.1} parent=0
    #allocation2 [shape = 'u8[8192]{0}', space=vmem, size = 0x2000, scoped, tag = 'input window, operand 0, single buffered']
    #allocation3 [shape = 's32[1]{0}', space=sflag, size = 0x4, scoped, tag = 'scoped memory for tpu_custom_call.1']
    #allocation4 [shape = 's32[1]{0}', space=sflag, size = 0x4, scoped, tag = 'scoped memory for tpu_custom_call.1']
    #allocation5 [shape = 'u8[8192]{0}', space=vmem, size = 0x2000, scoped, tag = 'input window, operand 1, single buffered']
    #allocation6 [shape = 's32[1]{0}', space=sflag, size = 0x4, scoped, tag = 'scoped memory for tpu_custom_call.1']
    #allocation7 [shape = 'u8[8192]{0}', space=vmem, size = 0x2000, scoped, tag = 'output window, operand 0, single buffered']
    %8 = vsyncpa [#allocation3], 0
    %9 = vsyncpa [#allocation6], 0
    %10 = vsyncpa [#allocation4], 0
    // Predicated region
    $region2: #{tpu_custom_call.1} parent=1 // pred_check
      _
    $region3: #{tpu_custom_call.1} parent=1 // pred_check_branch
      %12 = sbr.rel (0) target = $region5
    $region4: #{tpu_custom_call.1} parent=1 // pred_region
      %s14 = ssub.s32 256, 256
      %15 = vsyncadd [#allocation3], %s14
      %s16 = sshll.u32 [#allocation2], 4
      %s17 = int_to_ptr.vmem [resolvable:$true] %s16
      %22 = dma.hbm_to_vmem [thread:$0]  %s0, 256, %s17, [#allocation3], 128, 128, 8
    $region5: #{tpu_custom_call.1} parent=1 // pred_fallthru
      _
    // Predicated region
    $region6: #{tpu_custom_call.1} parent=1 // pred_check
      _
    $region7: #{tpu_custom_call.1} parent=1 // pred_check_branch
      %24 = sbr.rel (0) target = $region9
    $region8: #{tpu_custom_call.1} parent=1 // pred_region
      %s26 = ssub.s32 256, 256
      %27 = vsyncadd [#allocation6], %s26
      %s28 = sshll.u32 [#allocation5], 4
      %s29 = int_to_ptr.vmem [resolvable:$true] %s28
      %34 = dma.hbm_to_vmem [thread:$0]  %s1, 256, %s29, [#allocation6], 64, 64, 4
    $region9: #{tpu_custom_call.1} parent=1 // pred_fallthru
      _
    // Predicated region
    $region10: #{tpu_custom_call.1} parent=1 // pred_check
      _
    $region11: #{tpu_custom_call.1} parent=1 // pred_check_branch
      %36 = sbr.rel (0) target = $region13
    $region12: #{tpu_custom_call.1} parent=1 // pred_region
      _
    $region13: #{tpu_custom_call.1} parent=1 // pred_fallthru
      _
    // Predicated region
    $region14: #{tpu_custom_call.1} parent=1 // pred_check
      _
    $region15: #{tpu_custom_call.1} parent=1 // pred_check_branch
      %38 = sbr.rel (0) target = $region17
    $region16: #{tpu_custom_call.1} parent=1 // pred_region
      %39 = dma.done [#allocation3], 256
    $region17: #{tpu_custom_call.1} parent=1 // pred_fallthru
      _
    // Predicated region
    $region18: #{tpu_custom_call.1} parent=1 // pred_check
      _
    $region19: #{tpu_custom_call.1} parent=1 // pred_check_branch
      %41 = sbr.rel (0) target = $region21
    $region20: #{tpu_custom_call.1} parent=1 // pred_region
      %42 = dma.done [#allocation6], 256
    $region21: #{tpu_custom_call.1} parent=1 // pred_fallthru
      _
    %v44 = vld [vmem:[#allocation2] sm:$0xff]
    %v45 = vld [vmem:[#allocation2 + $0x8] sm:$0xff]
    %v46 = vpack.c.bf16 %v45, %v44
    %v47 = vld [vmem:[#allocation5] sm:$0xf]
    %v48 = vld [vmem:[#allocation5 + $0x4] sm:$0xf]
    %v49 = vld [vmem:[#allocation5 + $0x8] sm:$0xf]
    %v50 = vld [vmem:[#allocation5 + $0xc] sm:$0xf]
    %v51 = vld [vmem:[%s2] sm:$0x1]
    %v53 = vlaneseq
    %v54 = vshrl.u32 %v53, 7
    %v55 = vsub.s32 0, %v54
    %v56 = vrot.slane %v51, %v55
    %v62 = vunpack.c.l.b16 %v47
    %v63 = vunpack.c.l.b16 %v48
    %v64 = vunpack.c.l.b16 %v49
    %v65 = vunpack.c.l.b16 %v50
    %v66 = vpack.c.b16 %v63, %v62
    %v67 = vpack.c.b16 %v65, %v64
    %vm70 = vcmask 261120
    %v72 = vsel %vm70, %v46, 0
    %74 = vmatprep.subr.bf16.mxu0 0
    %75 = vmatpush1.bf16.msra.mxu0 %v66
    %76 = vmatprep.subr.bf16.mxu0 0
    %77 = vmatpush1.bf16.msra.mxu0 %v67
    %78 = vmatprep.subr.bf16.mxu0 0
    %79 = vmatpush1.bf16.msra.mxu0 0
    %80 = vmatprep.subr.bf16.mxu0 0
    %81 = vmatpush1.bf16.msra.mxu0 0
    %82 = vmatprep.subr.bf16.mxu0 0
    %83 = vmatpush1.bf16.msra.mxu0 0
    %84 = vmatprep.subr.bf16.mxu0 0
    %85 = vmatpush1.bf16.msra.mxu0 0
    %86 = vmatprep.subr.bf16.mxu0 0
    %87 = vmatpush1.bf16.msra.mxu0 0
    %88 = vmatprep.subr.bf16.mxu0 0
    %89 = vmatpush1.bf16.msra.mxu0 0
    %90 = vmatprep.subr.bf16.mxu0 0
    %91 = vmatpush1.bf16.msra.mxu0 0
    %92 = vmatprep.subr.bf16.mxu0 0
    %93 = vmatpush1.bf16.msra.mxu0 0
    %94 = vmatprep.subr.bf16.mxu0 0
    %95 = vmatpush1.bf16.msra.mxu0 0
    %96 = vmatprep.subr.bf16.mxu0 0
    %97 = vmatpush1.bf16.msra.mxu0 0
    %98 = vmatprep.subr.bf16.mxu0 0
    %99 = vmatpush1.bf16.msra.mxu0 0
    %100 = vmatprep.subr.bf16.mxu0 0
    %101 = vmatpush1.bf16.msra.mxu0 0
    %102 = vmatprep.subr.bf16.mxu0 0
    %103 = vmatpush1.bf16.msra.mxu0 0
    %104 = vmatprep.subr.bf16.mxu0 0
    %105 = vmatpush1.bf16.msra.mxu0 0
    %106 = vmatprep.mubr.bf16.mxu0 0
    %107 = vmatmul.mubr.bf16.gmra.mrb[0].mxu0 %v72
    %v108 = vpop.f32.mrb[0].mxu0
    %v109 = vadd.f32 %v56, %v108
    %v110 = vpop.f32.mrb[0].mxu0
    %v111 = vpop.f32.mrb[0].mxu0
    %v112 = vadd.f32 %v56, %v111
    %v113 = vpop.f32.mrb[0].mxu0
    %114 = vdwg.mxu0
    %115 = vst [vmem:[#allocation7] sm:$0xff] %v109
    %116 = vst [vmem:[#allocation7 + $0x8] sm:$0xff] %v112
    // Predicated region
    $region22: #{tpu_custom_call.1} parent=1 // pred_check
      _
    $region23: #{tpu_custom_call.1} parent=1 // pred_check_branch
      %118 = sbr.rel (0) target = $region25
    $region24: #{tpu_custom_call.1} parent=1 // pred_region
      %s120 = ssub.s32 256, 256
      %121 = vsyncadd [#allocation4], %s120
      %s122 = sshll.u32 [#allocation7], 4
      %s123 = int_to_ptr.vmem [resolvable:$true] %s122
      %128 = dma.vmem_to_hbm [thread:$0]  %s123, 256, %s3, [#allocation4], 128, 128, 8
    $region25: #{tpu_custom_call.1} parent=1 // pred_fallthru
      _
    // Predicated region
    $region26: #{tpu_custom_call.1} parent=1 // pred_check
      _
    $region27: #{tpu_custom_call.1} parent=1 // pred_check_branch
      %130 = sbr.rel (0) target = $region29
    $region28: #{tpu_custom_call.1} parent=1 // pred_region
      %131 = dma.done [#allocation4], 256
    $region29: #{tpu_custom_call.1} parent=1 // pred_fallthru
      _
    %132 = vsyncpa [#allocation3], 1
    %133 = vsyncpa [#allocation6], 1
    %134 = vsyncpa [#allocation4], 1

</llo_original>
